<compile_context>
chip_gen: v6e
topology: v6e:2x2x1
jax: 0.10.0
libtpu: 0.0.40
codegen_flags: <defaults>
</compile_context>

<pallas_src>
import jax
import jax.numpy as jnp
from jax.experimental import pallas as pl
from jax.experimental.pallas import tpu as pltpu

IN_DIM = 10
HID_DIM = 10
OUT_DIM = 5

LANES = 128          # TPU lane width; lane-dense padded output width
OUT_PAD = LANES
W_ROWS = 32          # bf16 weight slab rows (multiple of 16 for bf16 sublane tiling)
W2_ROW = 16          # W2 starts on a bf16-tile-aligned row
B_ROWS = 16          # f32 bias slab rows
B1_ROW = 0
B2_ROW = 8           # b2 starts on an f32-tile-aligned row
MAX_TB = 512         # target batch tile: >=512 rows ~ 85% of HBM roofline


def _round_up(n, m):
    return ((n + m - 1) // m) * m


def toy_mlp_kernel(x_ref, w_ref, b_ref, o_ref):
    """Fused Linear(10,10) -> ReLU -> Linear(10,128-padded) on one batch tile."""
    x = x_ref[...]                                     # (TB, 10) bf16
    w1 = w_ref[0:IN_DIM, 0:HID_DIM]                    # (10, 10)  bf16
    w2 = w_ref[W2_ROW:W2_ROW + HID_DIM, :]             # (10, 128) bf16, cols >= OUT_DIM are 0
    b1 = b_ref[B1_ROW:B1_ROW + 1, 0:HID_DIM]           # (1, 10)   f32
    b2 = b_ref[B2_ROW:B2_ROW + 1, :]                   # (1, 128)  f32, cols >= OUT_DIM are 0

    h = jnp.dot(x, w1, preferred_element_type=jnp.float32) + b1   # f32 accumulation
    h = jnp.maximum(h, 0.0).astype(jnp.bfloat16)                  # ReLU, back to bf16 for MXU
    y = jnp.dot(h, w2, preferred_element_type=jnp.float32) + b2   # (TB, 128) lane-dense
    o_ref[...] = y.astype(o_ref.dtype)


def pack_params(w1, b1, w2, b2):
    """Pack (w1,(10,10)) (b1,(10,)) (w2,(10,5)) (b2,(5,)) into two VMEM-resident slabs."""
    w_slab = jnp.zeros((W_ROWS, LANES), jnp.bfloat16)
    w_slab = w_slab.at[0:IN_DIM, 0:HID_DIM].set(jnp.asarray(w1, jnp.bfloat16))
    w_slab = w_slab.at[W2_ROW:W2_ROW + HID_DIM, 0:OUT_DIM].set(jnp.asarray(w2, jnp.bfloat16))
    b_slab = jnp.zeros((B_ROWS, LANES), jnp.float32)
    b_slab = b_slab.at[B1_ROW, 0:HID_DIM].set(jnp.asarray(b1, jnp.float32).reshape(-1))
    b_slab = b_slab.at[B2_ROW, 0:OUT_DIM].set(jnp.asarray(b2, jnp.float32).reshape(-1))
    return w_slab, b_slab


def toy_model_forward(x, w_slab, b_slab):
    B = x.shape[0]
    tb = min(MAX_TB, _round_up(B, 8))
    b_pad = _round_up(B, tb)

    xb = x.astype(jnp.bfloat16)
    if b_pad != B:
        xb = jnp.pad(xb, ((0, b_pad - B), (0, 0)))

    flops = 2 * b_pad * (IN_DIM * HID_DIM + HID_DIM * OUT_PAD)
    bytes_accessed = (b_pad * IN_DIM * 2      # bf16 activations in
                      + b_pad * OUT_PAD * 4   # f32 padded activations out
                      + W_ROWS * LANES * 2    # bf16 weight slab
                      + B_ROWS * LANES * 4)   # f32 bias slab

    out_padded = pl.pallas_call(
        toy_mlp_kernel,
        out_shape=jax.ShapeDtypeStruct((b_pad, OUT_PAD), jnp.float32),
        grid=(b_pad // tb,),
        in_specs=[
            pl.BlockSpec((tb, IN_DIM), lambda i: (i, 0)),        # activations: tiled on batch
            pl.BlockSpec((W_ROWS, LANES), lambda i: (0, 0)),     # weight slab: resident
            pl.BlockSpec((B_ROWS, LANES), lambda i: (0, 0)),     # bias slab: resident
        ],
        out_specs=pl.BlockSpec((tb, OUT_PAD), lambda i: (i, 0)),
        compiler_params=pltpu.CompilerParams(
            dimension_semantics=("parallel",),
            vmem_limit_bytes=32 * 1024 * 1024,
        ),
        cost_estimate=pl.CostEstimate(
            flops=flops, transcendentals=0, bytes_accessed=bytes_accessed),
    )(xb, w_slab, b_slab)

    return out_padded[:B, :OUT_DIM]


def init_params(key):
    """Deterministic init mimicking nn.Linear's uniform(-1/sqrt(fan_in), 1/sqrt(fan_in))."""
    k1, k2, k3, k4 = jax.random.split(key, 4)
    bound1 = 1.0 / jnp.sqrt(IN_DIM)
    bound2 = 1.0 / jnp.sqrt(HID_DIM)
    # stored as (in, out) == PyTorch weight.T
    w1 = jax.random.uniform(k1, (IN_DIM, HID_DIM), jnp.float32, -bound1, bound1)
    b1 = jax.random.uniform(k2, (HID_DIM,), jnp.float32, -bound1, bound1)
    w2 = jax.random.uniform(k3, (HID_DIM, OUT_DIM), jnp.float32, -bound2, bound2)
    b2 = jax.random.uniform(k4, (OUT_DIM,), jnp.float32, -bound2, bound2)
    return w1, b1, w2, b2


def reference_forward(x, w_slab, b_slab):
    """Pure-JAX reference using the exact same bf16-rounded parameters/activations."""
    w1 = w_slab[0:IN_DIM, 0:HID_DIM].astype(jnp.float32)
    w2 = w_slab[W2_ROW:W2_ROW + HID_DIM, 0:OUT_DIM].astype(jnp.float32)
    b1 = b_slab[B1_ROW, 0:HID_DIM]
    b2 = b_slab[B2_ROW, 0:OUT_DIM]
    xf = x.astype(jnp.bfloat16).astype(jnp.float32)
    h = jnp.maximum(xf @ w1 + b1, 0.0).astype(jnp.bfloat16).astype(jnp.float32)
    return h @ w2 + b2


if __name__ == "__main__":
    key = jax.random.PRNGKey(0)
    k_x, k_x2, k_p = jax.random.split(key, 3)

    w1, b1, w2, b2 = init_params(k_p)
    w_slab, b_slab = pack_params(w1, b1, w2, b2)

    fwd = jax.jit(toy_model_forward)

    # Small demo batch (single tile).
    B = 64
    x = jax.random.normal(k_x, (B, IN_DIM), dtype=jnp.float32)
    out = jax.block_until_ready(fwd(x, w_slab, b_slab))
    ref = reference_forward(x, w_slab, b_slab)
    assert out.shape == (B, OUT_DIM)
    assert jnp.allclose(out, ref, atol=2e-3, rtol=2e-3), float(jnp.max(jnp.abs(out - ref)))

    # Larger batch: exercises the multi-tile grid (TB=512) and tail padding.
    B2 = 1100
    x2 = jax.random.normal(k_x2, (B2, IN_DIM), dtype=jnp.float32)
    out2 = jax.block_until_ready(fwd(x2, w_slab, b_slab))
    ref2 = reference_forward(x2, w_slab, b_slab)
    assert out2.shape == (B2, OUT_DIM)
    assert jnp.allclose(out2, ref2, atol=2e-3, rtol=2e-3), float(jnp.max(jnp.abs(out2 - ref2)))

    print("KERNEL_OK")
</pallas_src>

<mosaic_0001>
module attributes {stable_mosaic.version = 11 : i64} {
  func.func @toy_mlp_kernel(%arg0: i32, %arg1: memref<64x10xbf16, #tpu.memory_space<vmem>>, %arg2: memref<32x128xbf16, #tpu.memory_space<vmem>>, %arg3: memref<16x128xf32, #tpu.memory_space<vmem>>, %arg4: memref<64x128xf32, #tpu.memory_space<vmem>>) attributes {dimension_semantics = [#tpu.dimension_semantics<parallel>], iteration_bounds = array<i64: 1>, scalar_prefetch = 0 : i64, scratch_operands = 0 : i64, tpu.core_type = #tpu.core_type<tc>, window_params = [{transform_indices = @transform_0, window_bounds = array<i64: 64, 10>}, {pipeline_mode = #tpu.pipeline_mode<synchronous>, transform_indices = @transform_1, window_bounds = array<i64: 32, 128>}, {pipeline_mode = #tpu.pipeline_mode<synchronous>, transform_indices = @transform_2, window_bounds = array<i64: 16, 128>}, {transform_indices = @transform_3, window_bounds = array<i64: 64, 128>}]} {
    %c0 = arith.constant 0 : index
    %c0_0 = arith.constant 0 : index
    %0 = vector.load %arg1[%c0, %c0_0] : memref<64x10xbf16, #tpu.memory_space<vmem>>, vector<64x10xbf16>
    %c0_1 = arith.constant 0 : index
    %c0_2 = arith.constant 0 : index
    %1 = vector.load %arg2[%c0_1, %c0_2] : memref<32x128xbf16, #tpu.memory_space<vmem>>, vector<10x10xbf16>
    %c16 = arith.constant 16 : index
    %c0_3 = arith.constant 0 : index
    %2 = vector.load %arg2[%c16, %c0_3] : memref<32x128xbf16, #tpu.memory_space<vmem>>, vector<10x128xbf16>
    %c0_4 = arith.constant 0 : index
    %c0_5 = arith.constant 0 : index
    %3 = vector.load %arg3[%c0_4, %c0_5] : memref<16x128xf32, #tpu.memory_space<vmem>>, vector<1x10xf32>
    %c8 = arith.constant 8 : index
    %c0_6 = arith.constant 0 : index
    %4 = vector.load %arg3[%c8, %c0_6] : memref<16x128xf32, #tpu.memory_space<vmem>>, vector<1x128xf32>
    %cst = arith.constant dense<0.000000e+00> : vector<64x10xf32>
    %5 = tpu.matmul %0, %1, %cst {dimension_numbers = #tpu.dot_dimension_numbers<[1], [0], [0], [1], [0, 0, 1, 1], [], []>} : vector<64x10xbf16>, vector<10x10xbf16>, vector<64x10xf32> -> vector<64x10xf32>
    %6 = vector.broadcast %3 : vector<1x10xf32> to vector<64x10xf32>
    %7 = arith.addf %5, %6 : vector<64x10xf32>
    %cst_7 = arith.constant 0.000000e+00 : f32
    %8 = vector.broadcast %cst_7 : f32 to vector<64x10xf32>
    %9 = arith.maximumf %7, %8 : vector<64x10xf32>
    %10 = arith.truncf %9 : vector<64x10xf32> to vector<64x10xbf16>
    %cst_8 = arith.constant dense<0.000000e+00> : vector<64x128xf32>
    %11 = tpu.matmul %10, %2, %cst_8 {dimension_numbers = #tpu.dot_dimension_numbers<[1], [0], [0], [1], [0, 0, 1, 1], [], []>} : vector<64x10xbf16>, vector<10x128xbf16>, vector<64x128xf32> -> vector<64x128xf32>
    %12 = vector.broadcast %4 : vector<1x128xf32> to vector<64x128xf32>
    %13 = arith.addf %11, %12 : vector<64x128xf32>
    %c0_9 = arith.constant 0 : index
    %c0_10 = arith.constant 0 : index
    %14 = vector.load %arg4[%c0_9, %c0_10] : memref<64x128xf32, #tpu.memory_space<vmem>>, vector<64x128xf32>
    tpu.vector_store %arg4[%c0_9, %c0_10], %13 {strides = array<i32>} : memref<64x128xf32, #tpu.memory_space<vmem>>, vector<64x128xf32>,
    return
  }
  func.func @transform_0(%arg0: i32) -> (i32, i32) {
    %c0_i32 = arith.constant 0 : i32
    %c0_i32_0 = arith.constant 0 : i32
    return %arg0, %c0_i32 : i32, i32
  }
  func.func @transform_1(%arg0: i32) -> (i32, i32) {
    %c0_i32 = arith.constant 0 : i32
    %c0_i32_0 = arith.constant 0 : i32
    %c0_i32_1 = arith.constant 0 : i32
    return %c0_i32, %c0_i32_0 : i32, i32
  }
  func.func @transform_2(%arg0: i32) -> (i32, i32) {
    %c0_i32 = arith.constant 0 : i32
    %c0_i32_0 = arith.constant 0 : i32
    %c0_i32_1 = arith.constant 0 : i32
    return %c0_i32, %c0_i32_0 : i32, i32
  }
  func.func @transform_3(%arg0: i32) -> (i32, i32) {
    %c0_i32 = arith.constant 0 : i32
    %c0_i32_0 = arith.constant 0 : i32
    return %arg0, %c0_i32 : i32, i32
  }
}

</mosaic_0001>

<llo_original>
// kernel: toy_model_forward.1
$region0: #{toy_model_forward.1}
  #allocation0 [shape = 'u32[]', space=smem, size = 0x4, offset = 0x4, fixed_abs, tag = 'smem constant byte address 0x4 - core index']
  #allocation1 [shape = 'u32[144,128]{1,0:T(1,128)}', space=vmem, size = 0x12000, scoped, tag = 'internal scratch']
  %s0 = inlined_call_operand.vmem [shape: bf16[64,10], index: 0, kind: input, shape index: {}]
  %s1 = inlined_call_operand.vmem [shape: bf16[32,128], index: 1, kind: input, shape index: {}]
  %s2 = inlined_call_operand.vmem [shape: f32[16,128], index: 2, kind: input, shape index: {}]
  %s3 = inlined_call_operand.vmem [shape: f32[64,128], index: 3, kind: output, shape index: {}]
  %s4 = sld [smem:[#allocation0]]
  $region22: #{toy_model_forward.1} parent=0
    _
  %s6 = ssub.s32 1, %s4
  %s7 = scalar_select 0, %s6, %s4
  // Predicated region
  $region2: #{toy_model_forward.1} parent=0 // pred_check
    _
  $region3: #{toy_model_forward.1} parent=0 // pred_check_branch
    %9 = sbr.rel (0) target = $region5
  $region4: #{toy_model_forward.1} parent=0 // pred_region
    _
  $region5: #{toy_model_forward.1} parent=0 // pred_fallthru
    _
  // Predicated region
  $region6: #{toy_model_forward.1} parent=0 // pred_check
    _
  $region7: #{toy_model_forward.1} parent=0 // pred_check_branch
    %11 = sbr.rel (0) target = $region9
  $region8: #{toy_model_forward.1} parent=0 // pred_region
    _
  $region9: #{toy_model_forward.1} parent=0 // pred_fallthru
    _
  // Predicated region
  $region10: #{toy_model_forward.1} parent=0 // pred_check
    _
  $region11: #{toy_model_forward.1} parent=0 // pred_check_branch
    %13 = sbr.rel (0) target = $region13
  $region12: #{toy_model_forward.1} parent=0 // pred_region
    _
  $region13: #{toy_model_forward.1} parent=0 // pred_fallthru
    _
  %v15 = vld [vmem:[%s0] sm:$0xf]
  %v16 = vld [vmem:[%s0 + $0x4] sm:$0xf]
  %v17 = vld [vmem:[%s0 + $0x8] sm:$0xf]
  %v18 = vld [vmem:[%s0 + $0xc] sm:$0xf]
  %v19 = vld [vmem:[%s0 + $0x10] sm:$0xf]
  %v20 = vld [vmem:[%s0 + $0x14] sm:$0xf]
  %v21 = vld [vmem:[%s0 + $0x18] sm:$0xf]
  %v22 = vld [vmem:[%s0 + $0x1c] sm:$0xf]
  %v23 = vld [vmem:[%s1] sm:$0xf]
  %v24 = vld [vmem:[%s1 + $0x4] sm:$0x1]
  %v25 = vld [vmem:[%s1 + $0x8] sm:$0xf]
  %v26 = vld [vmem:[%s1 + $0xc] sm:$0x1]
  %v27 = vld [vmem:[%s2] sm:$0x1]
  %v28 = vld [vmem:[%s2 + $0x8] sm:$0x1]
  %v29 = vlaneseq
  %v30 = vshrl.u32 %v29, 7
  %v31 = vsub.s32 0, %v30
  %v32 = vrot.slane %v27, %v31
  %v41 = vunpack.c.l.b16 %v15
  %v42 = vunpack.c.l.b16 %v16
  %v43 = vunpack.c.l.b16 %v17
  %v44 = vunpack.c.l.b16 %v18
  %v45 = vunpack.c.l.b16 %v19
  %v46 = vunpack.c.l.b16 %v20
  %v47 = vunpack.c.l.b16 %v21
  %v48 = vunpack.c.l.b16 %v22
  %v49 = vpack.c.b16 %v42, %v41
  %v50 = vpack.c.b16 %v44, %v43
  %v51 = vpack.c.b16 %v46, %v45
  %v52 = vpack.c.b16 %v48, %v47
  %v55 = vunpack.c.l.b16 %v23
  %v56 = vunpack.c.l.b16 %v24
  %v57 = vpack.c.b16 %v56, %v55
  %vm58 = vcmask 80896
  %v60 = vsel %vm58, %v49, 0
  %v63 = vsel %vm58, %v50, 0
  %v66 = vsel %vm58, %v51, 0
  %v69 = vsel %vm58, %v52, 0
  %vm71 = vcmask 1044480
  %v73 = vsel %vm71, %v57, 0
  %75 = vmatprep.subr.bf16.mxu0 0
  %76 = vmatpush1.bf16.msra.mxu0 0
  %77 = vmatprep.subr.bf16.mxu0 0
  %78 = vmatpush1.bf16.msra.mxu0 0
  %79 = vmatprep.subr.bf16.mxu0 0
  %80 = vmatpush1.bf16.msra.mxu0 0
  %81 = vmatprep.subr.bf16.mxu0 0
  %82 = vmatpush1.bf16.msra.mxu0 0
  %83 = vmatprep.subr.bf16.mxu0 0
  %84 = vmatpush1.bf16.msra.mxu0 0
  %85 = vmatprep.subr.bf16.mxu0 0
  %86 = vmatpush1.bf16.msra.mxu0 0
  %87 = vmatprep.subr.bf16.mxu0 0
  %88 = vmatpush1.bf16.msra.mxu0 0
  %89 = vmatprep.subr.bf16.mxu0 0
  %90 = vmatpush1.bf16.msra.mxu0 %v73
  %91 = vmatprep.subr.bf16.mxu0 0
  %92 = vmatpush2.bf16.msra.mxu0 0
  %93 = vmatprep.subr.bf16.mxu0 0
  %94 = vmatpush2.bf16.msra.mxu0 0
  %95 = vmatprep.subr.bf16.mxu0 0
  %96 = vmatpush2.bf16.msra.mxu0 0
  %97 = vmatprep.subr.bf16.mxu0 0
  %98 = vmatpush2.bf16.msra.mxu0 0
  %99 = vmatprep.subr.bf16.mxu0 0
  %100 = vmatpush2.bf16.msra.mxu0 0
  %101 = vmatprep.subr.bf16.mxu0 0
  %102 = vmatpush2.bf16.msra.mxu0 0
  %103 = vmatprep.subr.bf16.mxu0 0
  %104 = vmatpush2.bf16.msra.mxu0 0
  %105 = vmatprep.subr.bf16.mxu0 0
  %106 = vmatpush2.bf16.msra.mxu0 0
  %107 = vmatprep.mubr.bf16.mxu0 0
  %108 = vmatmul.mubr.bf16.gmra.mxu0 %v60
  %v109 = vpop.f32.mrf.mxu0
  %v110 = vadd.f32 %v32, %v109
  %v111 = vpop.f32.mrf.mxu0
  %v112 = vpop.f32.mrf.mxu0
  %v113 = vadd.f32 %v32, %v112
  %v114 = vpop.f32.mrf.mxu0
  %115 = vmatprep.mubr.bf16.mxu0 0
  %116 = vmatmul.mubr.bf16.gmra.mxu0 %v63
  %v117 = vpop.f32.mrf.mxu0
  %v118 = vadd.f32 %v32, %v117
  %v119 = vpop.f32.mrf.mxu0
  %v120 = vpop.f32.mrf.mxu0
  %v121 = vadd.f32 %v32, %v120
  %v122 = vpop.f32.mrf.mxu0
  %123 = vmatprep.mubr.bf16.mxu0 0
  %124 = vmatmul.mubr.bf16.gmra.mxu0 %v66
  %v125 = vpop.f32.mrf.mxu0
  %v126 = vadd.f32 %v32, %v125
  %v127 = vpop.f32.mrf.mxu0
  %v128 = vpop.f32.mrf.mxu0
  %v129 = vadd.f32 %v32, %v128
  %v130 = vpop.f32.mrf.mxu0
  %131 = vmatprep.mubr.bf16.mxu0 0
  %132 = vmatmul.mubr.bf16.gmra.mxu0 %v69
  %v133 = vpop.f32.mrf.mxu0
  %v134 = vadd.f32 %v32, %v133
  %v135 = vpop.f32.mrf.mxu0
  %v136 = vpop.f32.mrf.mxu0
  %v137 = vadd.f32 %v32, %v136
  %v138 = vpop.f32.mrf.mxu0
  %139 = vdwg.mxu0
  %v140 = vmax.f32 %v110, 0.0
  %v141 = vmax.f32 %v113, 0.0
  %v142 = vmax.f32 %v118, 0.0
  %v143 = vmax.f32 %v121, 0.0
  %v144 = vmax.f32 %v126, 0.0
  %v145 = vmax.f32 %v129, 0.0
  %v146 = vmax.f32 %v134, 0.0
  %v147 = vmax.f32 %v137, 0.0
  %v148 = vpack.c.bf16 %v141, %v140
  %v149 = vpack.c.bf16 %v143, %v142
  %v150 = vpack.c.bf16 %v145, %v144
  %v151 = vpack.c.bf16 %v147, %v146
  %v152 = vlaneseq
  %v153 = vshrl.u32 %v152, 7
  %v154 = vsub.s32 0, %v153
  %v155 = vrot.slane %v28, %v154
  %v158 = vunpack.c.l.b16 %v25
  %v159 = vunpack.c.l.b16 %v26
  %v160 = vpack.c.b16 %v159, %v158
  %v162 = vsel %vm58, %v148, 0
  %v165 = vsel %vm58, %v149, 0
  %v168 = vsel %vm58, %v150, 0
  %v171 = vsel %vm58, %v151, 0
  %v174 = vsel %vm71, %v160, 0
  %176 = vmatprep.subr.bf16.mxu0 0
  %177 = vmatpush1.bf16.msra.mxu0 0
  %178 = vmatprep.subr.bf16.mxu0 0
  %179 = vmatpush1.bf16.msra.mxu0 0
  %180 = vmatprep.subr.bf16.mxu0 0
  %181 = vmatpush1.bf16.msra.mxu0 0
  %182 = vmatprep.subr.bf16.mxu0 0
  %183 = vmatpush1.bf16.msra.mxu0 0
  %184 = vmatprep.subr.bf16.mxu0 0
  %185 = vmatpush1.bf16.msra.mxu0 0
  %186 = vmatprep.subr.bf16.mxu0 0
  %187 = vmatpush1.bf16.msra.mxu0 0
  %188 = vmatprep.subr.bf16.mxu0 0
  %189 = vmatpush1.bf16.msra.mxu0 0
  %190 = vmatprep.subr.bf16.mxu0 0
  %191 = vmatpush1.bf16.msra.mxu0 %v174
  %192 = vmatprep.subr.bf16.mxu0 0
  %193 = vmatpush2.bf16.msra.mxu0 0
  %194 = vmatprep.subr.bf16.mxu0 0
  %195 = vmatpush2.bf16.msra.mxu0 0
  %196 = vmatprep.subr.bf16.mxu0 0
  %197 = vmatpush2.bf16.msra.mxu0 0
  %198 = vmatprep.subr.bf16.mxu0 0
  %199 = vmatpush2.bf16.msra.mxu0 0
  %200 = vmatprep.subr.bf16.mxu0 0
  %201 = vmatpush2.bf16.msra.mxu0 0
  %202 = vmatprep.subr.bf16.mxu0 0
  %203 = vmatpush2.bf16.msra.mxu0 0
  %204 = vmatprep.subr.bf16.mxu0 0
  %205 = vmatpush2.bf16.msra.mxu0 0
  %206 = vmatprep.subr.bf16.mxu0 0
  %207 = vmatpush2.bf16.msra.mxu0 0
  %208 = vmatprep.mubr.bf16.mxu0 0
  %209 = vmatmul.mubr.bf16.gmra.mxu0 %v162
  %v210 = vpop.f32.mrf.mxu0
  %v211 = vadd.f32 %v155, %v210
  %v212 = vpop.f32.mrf.mxu0
  %v213 = vpop.f32.mrf.mxu0
  %v214 = vadd.f32 %v155, %v213
  %v215 = vpop.f32.mrf.mxu0
  %216 = vmatprep.mubr.bf16.mxu0 0
  %217 = vmatmul.mubr.bf16.gmra.mxu0 %v165
  %v218 = vpop.f32.mrf.mxu0
  %v219 = vadd.f32 %v155, %v218
  %v220 = vpop.f32.mrf.mxu0
  %v221 = vpop.f32.mrf.mxu0
  %v222 = vadd.f32 %v155, %v221
  %v223 = vpop.f32.mrf.mxu0
  %224 = vmatprep.mubr.bf16.mxu0 0
  %225 = vmatmul.mubr.bf16.gmra.mxu0 %v168
  %v226 = vpop.f32.mrf.mxu0
  %v227 = vadd.f32 %v155, %v226
  %v228 = vpop.f32.mrf.mxu0
  %v229 = vpop.f32.mrf.mxu0
  %v230 = vadd.f32 %v155, %v229
  %v231 = vpop.f32.mrf.mxu0
  %232 = vmatprep.mubr.bf16.mxu0 0
  %233 = vmatmul.mubr.bf16.gmra.mxu0 %v171
  %v234 = vpop.f32.mrf.mxu0
  %v235 = vadd.f32 %v155, %v234
  %v236 = vpop.f32.mrf.mxu0
  %v237 = vpop.f32.mrf.mxu0
  %v238 = vadd.f32 %v155, %v237
  %v239 = vpop.f32.mrf.mxu0
  %240 = vdwg.mxu0
  %241 = vst [vmem:[%s3] sm:$0xff] %v211
  %242 = vst [vmem:[%s3 + $0x8] sm:$0xff] %v214
  %243 = vst [vmem:[%s3 + $0x10] sm:$0xff] %v219
  %244 = vst [vmem:[%s3 + $0x18] sm:$0xff] %v222
  %245 = vst [vmem:[%s3 + $0x20] sm:$0xff] %v227
  %246 = vst [vmem:[%s3 + $0x28] sm:$0xff] %v230
  %247 = vst [vmem:[%s3 + $0x30] sm:$0xff] %v235
  %248 = vst [vmem:[%s3 + $0x38] sm:$0xff] %v238
  // Predicated region
  $region14: #{toy_model_forward.1} parent=0 // pred_check
    _
  $region15: #{toy_model_forward.1} parent=0 // pred_check_branch
    %250 = sbr.rel (0) target = $region17
  $region16: #{toy_model_forward.1} parent=0 // pred_region
    _
  $region17: #{toy_model_forward.1} parent=0 // pred_fallthru
    _
  // Predicated region
  $region18: #{toy_model_forward.1} parent=0 // pred_check
    _
  $region19: #{toy_model_forward.1} parent=0 // pred_check_branch
    %252 = sbr.rel (0) target = $region21
  $region20: #{toy_model_forward.1} parent=0 // pred_region
    _
  $region21: #{toy_model_forward.1} parent=0 // pred_fallthru
    _

</llo_original>
